<compile_context>
chip_gen: v5e
topology: v5e:2x2
jax: 0.10.0
libtpu: 0.0.40
codegen_flags: <defaults>
</compile_context>

<pallas_src>
import math

import jax
import jax.numpy as jnp
from jax.experimental import pallas as pl
from jax.experimental.pallas import tpu as pltpu


# ----------------------------- kernels --------------------------------------

def _affine_kernel(x_ref, w_ref, b_ref, o_ref):
    # o = x @ W + b
    acc = jnp.dot(x_ref[...], w_ref[...], preferred_element_type=jnp.float32)
    o_ref[...] = (acc + b_ref[...]).astype(o_ref.dtype)


def _fourier_kernel(x_ref, w_ref, b_ref, o_ref):
    # o = sin(x @ [2piP | 2piP] + [0 | pi/2])  ==  [sin(xp) | cos(xp)]
    acc = jnp.dot(x_ref[...], w_ref[...], preferred_element_type=jnp.float32)
    o_ref[...] = jnp.sin(acc + b_ref[...]).astype(o_ref.dtype)


# ----------------------------- tiling helpers --------------------------------

_VMEM_TILE_BUDGET = 8 * 1024 * 1024   # double-buffered in+out tile bytes
_MIN_SPLIT_ROWS = 1024                # above this, force >=2 grid steps (v7x megacore)
_JNP_FALLBACK_ROWS = 256              # below this, plain jnp (fusable) beats dispatch


def _round_up(v, m):
    return (v + m - 1) // m * m


def _row_tile(n_rows, in_w, out_w, itemsize=4):
    """Rows per grid step: as large as the VMEM budget allows (amortizes the
    ~0.35 us/step pipeline overhead), >=2 steps for sizeable N (megacore)."""
    per_row = 2 * (_round_up(in_w, 128) + _round_up(out_w, 128)) * itemsize
    budget_rows = max(8, (_VMEM_TILE_BUDGET // per_row) // 8 * 8)
    if n_rows <= _MIN_SPLIT_ROWS:
        return n_rows                       # single step; full extent is legal
    tile = min(budget_rows, _round_up(pl.cdiv(n_rows, 2), 8))
    return max(8, tile)


def _pick_group(n_rows, ndp, nde, max_group=16):
    """Largest power-of-two G dividing n_rows such that grouping pushes the
    narrow feature widths toward the 128-lane vreg width."""
    target = 1
    while target * min(ndp, nde) < 128 and target < max_group:
        target *= 2
    g = 1
    while g < target and n_rows % (2 * g) == 0:
        g *= 2
    return g


# ----------------------------- pallas wrapper --------------------------------

def _encode_2d(x2d, w, b, *, apply_sin, row_tile=None):
    """x2d: (N, K), w: (K, M), b: (1, M) -> (N, M)  [optionally sin()]"""
    n, in_w = x2d.shape
    out_w = w.shape[1]
    tile = _row_tile(n, in_w, out_w) if row_tile is None else row_tile
    tile = min(tile, n)
    kernel = _fourier_kernel if apply_sin else _affine_kernel
    return pl.pallas_call(
        kernel,
        out_shape=jax.ShapeDtypeStruct((n, out_w), x2d.dtype),
        grid=(pl.cdiv(n, tile),),
        in_specs=[
            pl.BlockSpec((tile, in_w), lambda i: (i, 0)),
            pl.BlockSpec((in_w, out_w), lambda i: (0, 0)),   # resident constant
            pl.BlockSpec((1, out_w), lambda i: (0, 0)),       # resident constant
        ],
        out_specs=pl.BlockSpec((tile, out_w), lambda i: (i, 0)),
        compiler_params=pltpu.CompilerParams(
            dimension_semantics=("parallel",)),
    )(x2d, w, b)


# ----------------------------- module ----------------------------------------

class PositionEncoder:
    """JAX/Pallas port of the PyTorch PositionEncoder (forward only)."""

    def __init__(self, ndp, nde, mode, init_factor, key):
        self.ndp, self.nde, self.mode = ndp, nde, mode
        if mode == "linear":
            kw, kb = jax.random.split(key)
            bound = 1.0 / math.sqrt(ndp)
            # stored as (ndp, nde): x @ W  ==  torch's x @ W.T
            self.weight = jax.random.uniform(kw, (ndp, nde), jnp.float32,
                                             -bound, bound)
            self.bias = jax.random.uniform(kb, (nde,), jnp.float32,
                                           -bound, bound)
            base_w = self.weight
            base_b = self.bias.reshape(1, nde)
        elif mode == "fourier":
            assert nde % 2 == 0, "require even embedding dimension"
            self.proj_layer = jax.random.normal(key, (ndp, nde // 2),
                                                jnp.float32) * init_factor
            p = (2.0 * math.pi) * self.proj_layer            # fold 2*pi once
            base_w = jnp.concatenate([p, p], axis=1)          # (ndp, nde)
            base_b = jnp.concatenate(
                [jnp.zeros((1, nde // 2), jnp.float32),
                 jnp.full((1, nde // 2), 0.5 * math.pi, jnp.float32)], axis=1)
        else:
            raise ValueError(mode)
        self._grouped = {1: (base_w, base_b)}                 # cache per group G

    def _params_for_group(self, g):
        if g not in self._grouped:
            w1, b1 = self._grouped[1]
            wg = jnp.kron(jnp.eye(g, dtype=w1.dtype), w1)     # block-diagonal
            bg = jnp.tile(b1, (1, g))
            self._grouped[g] = (wg, bg)
        return self._grouped[g]

    def __call__(self, x, *, row_tile=None, min_pallas_rows=_JNP_FALLBACK_ROWS):
        ndp, nde = self.ndp, self.nde
        lead = x.shape[:-1]
        xf = x.reshape(-1, ndp)                                # free (contiguous)
        n = xf.shape[0]
        apply_sin = (self.mode == "fourier")

        if n < min_pallas_rows:
            # tiny: let XLA fuse a small dot + elementwise into neighbors
            w, b = self._grouped[1]
            y = jnp.dot(xf, w, preferred_element_type=jnp.float32) + b
            if apply_sin:
                y = jnp.sin(y)
            return y.astype(x.dtype).reshape(*lead, nde)

        g = _pick_group(n, ndp, nde)
        w, b = self._params_for_group(g)
        xg = xf.reshape(n // g, g * ndp)                       # free (contiguous)
        yg = _encode_2d(xg, w, b, apply_sin=apply_sin, row_tile=row_tile)
        return yg.reshape(*lead, nde)                          # free (contiguous)


# ------------------------------- main -----------------------------------------

if __name__ == "__main__":
    key = jax.random.PRNGKey(0)
    k1, k2, k3, klin, kfou = jax.random.split(key, 5)
    ndp, nde = 16, 32

    # small -> jnp-fallback path; mid (1035 rows, odd) -> ungrouped Pallas,
    # 2-step grid with ragged last block; big (2048 rows) -> grouped G=8
    # lane-dense Pallas path.
    x_small = jax.random.normal(k1, (2, 8, ndp), jnp.float32)
    x_mid = jax.random.normal(k2, (3, 345, ndp), jnp.float32)
    x_big = jax.random.normal(k3, (4, 512, ndp), jnp.float32)

    enc_lin = PositionEncoder(ndp, nde, "linear", init_factor=1.0, key=klin)
    enc_fou = PositionEncoder(ndp, nde, "fourier", init_factor=0.1, key=kfou)

    def ref_lin(x):
        return x @ enc_lin.weight + enc_lin.bias

    def ref_fou(x):
        xp = jnp.matmul(2.0 * math.pi * x, enc_fou.proj_layer)
        return jnp.concatenate([jnp.sin(xp), jnp.cos(xp)], axis=-1)

    for x in (x_small, x_mid, x_big):
        y = enc_lin(x)
        jax.block_until_ready(y)
        assert y.shape == x.shape[:-1] + (nde,)
        assert jnp.allclose(y, ref_lin(x), atol=1e-5), "linear mismatch"

        y = enc_fou(x)
        jax.block_until_ready(y)
        assert y.shape == x.shape[:-1] + (nde,)
        assert jnp.allclose(y, ref_fou(x), atol=2e-5), "fourier mismatch"

    # Force a multi-step grid with a ragged last block on the grouped path
    # (2048 rows -> 256 grouped rows -> tiles of 96: 96 + 96 + 64).
    y = enc_lin(x_big, row_tile=96)
    jax.block_until_ready(y)
    assert jnp.allclose(y, ref_lin(x_big), atol=1e-5), "linear (tiled) mismatch"

    y = enc_fou(x_big, row_tile=96)
    jax.block_until_ready(y)
    assert jnp.allclose(y, ref_fou(x_big), atol=2e-5), "fourier (tiled) mismatch"

    print("KERNEL_OK")
</pallas_src>

<mosaic_0001>
module attributes {stable_mosaic.version = 11 : i64} {
  func.func @_affine_kernel(%arg0: i32, %arg1: memref<520x16xf32, #tpu.memory_space<vmem>>, %arg2: memref<16x32xf32, #tpu.memory_space<vmem>>, %arg3: memref<1x32xf32, #tpu.memory_space<vmem>>, %arg4: memref<520x32xf32, #tpu.memory_space<vmem>>) attributes {dimension_semantics = [#tpu.dimension_semantics<parallel>], iteration_bounds = array<i64: 2>, scalar_prefetch = 0 : i64, scratch_operands = 0 : i64, tpu.core_type = #tpu.core_type<tc>, window_params = [{transform_indices = @transform_0, window_bounds = array<i64: 520, 16>}, {pipeline_mode = #tpu.pipeline_mode<synchronous>, transform_indices = @transform_1, window_bounds = array<i64: 16, 32>}, {pipeline_mode = #tpu.pipeline_mode<synchronous>, transform_indices = @transform_2, window_bounds = array<i64: 1, 32>}, {transform_indices = @transform_3, window_bounds = array<i64: 520, 32>}]} {
    %c0 = arith.constant 0 : index
    %c0_0 = arith.constant 0 : index
    %0 = vector.load %arg1[%c0, %c0_0] : memref<520x16xf32, #tpu.memory_space<vmem>>, vector<520x16xf32>
    %c0_1 = arith.constant 0 : index
    %c0_2 = arith.constant 0 : index
    %1 = vector.load %arg2[%c0_1, %c0_2] : memref<16x32xf32, #tpu.memory_space<vmem>>, vector<16x32xf32>
    %cst = arith.constant dense<0.000000e+00> : vector<520x32xf32>
    %2 = tpu.matmul %0, %1, %cst {dimension_numbers = #tpu.dot_dimension_numbers<[1], [0], [0], [1], [0, 0, 1, 1], [], []>} : vector<520x16xf32>, vector<16x32xf32>, vector<520x32xf32> -> vector<520x32xf32>
    %c0_3 = arith.constant 0 : index
    %c0_4 = arith.constant 0 : index
    %3 = vector.load %arg3[%c0_3, %c0_4] : memref<1x32xf32, #tpu.memory_space<vmem>>, vector<1x32xf32>
    %4 = vector.broadcast %3 : vector<1x32xf32> to vector<520x32xf32>
    %5 = arith.addf %2, %4 : vector<520x32xf32>
    %c0_5 = arith.constant 0 : index
    %c0_6 = arith.constant 0 : index
    %6 = vector.load %arg4[%c0_5, %c0_6] : memref<520x32xf32, #tpu.memory_space<vmem>>, vector<520x32xf32>
    tpu.vector_store %arg4[%c0_5, %c0_6], %5 {strides = array<i32>} : memref<520x32xf32, #tpu.memory_space<vmem>>, vector<520x32xf32>,
    return
  }
  func.func @transform_0(%arg0: i32) -> (i32, i32) {
    %c0_i32 = arith.constant 0 : i32
    %c0_i32_0 = arith.constant 0 : i32
    return %arg0, %c0_i32 : i32, i32
  }
  func.func @transform_1(%arg0: i32) -> (i32, i32) {
    %c0_i32 = arith.constant 0 : i32
    %c0_i32_0 = arith.constant 0 : i32
    %c0_i32_1 = arith.constant 0 : i32
    return %c0_i32, %c0_i32_0 : i32, i32
  }
  func.func @transform_2(%arg0: i32) -> (i32, i32) {
    %c0_i32 = arith.constant 0 : i32
    %c0_i32_0 = arith.constant 0 : i32
    %c0_i32_1 = arith.constant 0 : i32
    return %c0_i32, %c0_i32_0 : i32, i32
  }
  func.func @transform_3(%arg0: i32) -> (i32, i32) {
    %c0_i32 = arith.constant 0 : i32
    %c0_i32_0 = arith.constant 0 : i32
    return %arg0, %c0_i32 : i32, i32
  }
}

</mosaic_0001>

<llo_original>
// kernel: tpu_custom_call.1
$region0: #{tpu_custom_call.1}
  #allocation0 [shape = 'u32[]', space=smem, size = 0x4, offset = 0x4, fixed_abs, tag = 'smem constant byte address 0x4 - core index']
  #allocation1 [shape = 'u32[72,128]{1,0:T(1,128)}', space=vmem, size = 0x9000, scoped, tag = 'internal scratch']
  %s0 = inlined_call_operand.vmem [shape: f32[1035,16], index: 0, kind: input, shape index: {}]
  %s1 = inlined_call_operand.vmem [shape: f32[16,32], index: 1, kind: input, shape index: {}]
  %s2 = inlined_call_operand.vmem [shape: f32[1,32], index: 2, kind: input, shape index: {}]
  %s3 = inlined_call_operand.vmem [shape: f32[1035,32], index: 3, kind: output, shape index: {}]
  %s4 = sld [smem:[#allocation0]]
  $region45: #{tpu_custom_call.1} parent=0
    _
  %s6 = ssub.s32 1, %s4
  %s7 = scalar_select 0, %s6, %s4
  loop: start=0, step=1, limit=4
  $region2: #{tpu_custom_call.1} parent=0 // loop_pre_header
    _
  $region3: #{tpu_custom_call.1} parent=0 // loop_header
    %s9 = sphi 0, %s13
    %p10 = scmp.ge.s32.totalorder %s9, 4
    %s19 = sphi 0, %s21
    %s22 = sphi 0, %s19
    %s23 = sphi 0, %s22
    %s39 = sphi 0, %s23
    %s43 = sphi 0, %s43
    %s45 = sphi 0, %s43
    %s46 = sphi 0, %s45
    %s60 = sphi 0, %s46
    %s64 = sphi 0, %s64
    %s66 = sphi 0, %s64
    %s67 = sphi 0, %s66
    %s81 = sphi 0, %s67
    %s87 = sphi 0, %s89
    %s90 = sphi 0, %s87
    %s91 = sphi 0, %s90
    %s107 = sphi 0, %s91
  $region4: #{tpu_custom_call.1} parent=0 // loop_header_branch
    %12 = sbr.rel (%p10) target = $region8
  $region5: #{tpu_custom_call.1} parent=0 // loop_body
    %s14 = ssub.s32 %s9, 1
    %s15 = ssub.s32 %s9, 2
    %s16 = sadd.s32 %s9, 1
    %s17 = ssub.s32 %s9, %s16
    %p18 = scmp.eq.s32.totalorder %s17, 0
    %s20 = sadd.s32 %s19, 1
    %s21 = scalar_select %p18, %s19, %s20
    %p24 = pneg %p18
    %p25 = scmp.eq.s32.totalorder %s9, 1
    %p26 = por %p24, %p25
    %p27 = scmp.ne.s32.totalorder %s19, %s22
    %p28 = scmp.eq.s32.totalorder %s9, 0
    %p29 = por %p27, %p28
    %p30 = scmp.ne.s32.totalorder %s19, %s22
    %p31 = scmp.eq.s32.totalorder %s14, 1
    %p32 = por %p30, %p31
    %p33 = scmp.ne.s32.totalorder %s22, %s23
    %p34 = scmp.eq.s32.totalorder %s14, 0
    %p35 = por %p33, %p34
    %p36 = scmp.ne.s32.totalorder %s22, %s23
    %p37 = scmp.eq.s32.totalorder %s15, 1
    %p38 = por %p36, %p37
    %p40 = scmp.ne.s32.totalorder %s23, %s39
    %p41 = scmp.eq.s32.totalorder %s15, 0
    %p42 = por %p40, %p41
    %s44 = sadd.s32 %s43, 1
    %p47 = scmp.eq.s32.totalorder %s9, 1
    %p48 = scmp.ne.s32.totalorder %s43, %s45
    %p49 = scmp.eq.s32.totalorder %s9, 0
    %p50 = por %p48, %p49
    %p51 = scmp.ne.s32.totalorder %s43, %s45
    %p52 = scmp.eq.s32.totalorder %s14, 1
    %p53 = por %p51, %p52
    %p54 = scmp.ne.s32.totalorder %s45, %s46
    %p55 = scmp.eq.s32.totalorder %s14, 0
    %p56 = por %p54, %p55
    %p57 = scmp.ne.s32.totalorder %s45, %s46
    %p58 = scmp.eq.s32.totalorder %s15, 1
    %p59 = por %p57, %p58
    %p61 = scmp.ne.s32.totalorder %s46, %s60
    %p62 = scmp.eq.s32.totalorder %s15, 0
    %p63 = por %p61, %p62
    %s65 = sadd.s32 %s64, 1
    %p68 = scmp.eq.s32.totalorder %s9, 1
    %p69 = scmp.ne.s32.totalorder %s64, %s66
    %p70 = scmp.eq.s32.totalorder %s9, 0
    %p71 = por %p69, %p70
    %p72 = scmp.ne.s32.totalorder %s64, %s66
    %p73 = scmp.eq.s32.totalorder %s14, 1
    %p74 = por %p72, %p73
    %p75 = scmp.ne.s32.totalorder %s66, %s67
    %p76 = scmp.eq.s32.totalorder %s14, 0
    %p77 = por %p75, %p76
    %p78 = scmp.ne.s32.totalorder %s66, %s67
    %p79 = scmp.eq.s32.totalorder %s15, 1
    %p80 = por %p78, %p79
    %p82 = scmp.ne.s32.totalorder %s67, %s81
    %p83 = scmp.eq.s32.totalorder %s15, 0
    %p84 = por %p82, %p83
    %s85 = ssub.s32 %s9, %s16
    %p86 = scmp.eq.s32.totalorder %s85, 0
    %s88 = sadd.s32 %s87, 1
    %s89 = scalar_select %p86, %s87, %s88
    %p92 = pneg %p86
    %p93 = scmp.eq.s32.totalorder %s9, 1
    %p94 = por %p92, %p93
    %p95 = scmp.ne.s32.totalorder %s87, %s90
    %p96 = scmp.eq.s32.totalorder %s9, 0
    %p97 = por %p95, %p96
    %p98 = scmp.ne.s32.totalorder %s87, %s90
    %p99 = scmp.eq.s32.totalorder %s14, 1
    %p100 = por %p98, %p99
    %p101 = scmp.ne.s32.totalorder %s90, %s91
    %p102 = scmp.eq.s32.totalorder %s14, 0
    %p103 = por %p101, %p102
    %p104 = scmp.ne.s32.totalorder %s90, %s91
    %p105 = scmp.eq.s32.totalorder %s15, 1
    %p106 = por %p104, %p105
    %p108 = scmp.ne.s32.totalorder %s91, %s107
    %p109 = scmp.eq.s32.totalorder %s15, 0
    %p110 = por %p108, %p109
    %p111 = scmp.le.s32.totalorder 1, %s9
    %p112 = scmp.lt.s32.totalorder %s9, 3
    %p113 = pnand %p111, %p112
    %p114 = pneg %p113
    // Predicated region
    $region9: #{tpu_custom_call.1} parent=5 // pred_check
      _
    $region10: #{tpu_custom_call.1} parent=5 // pred_check_branch
      %116 = sbr.rel (%p113) target = $region12
    $region11: #{tpu_custom_call.1} parent=5 // pred_region
      %s117 = ssub.s32 %s9, 1
      // Predicated region
      $region13: #{tpu_custom_call.1} parent=11 // pred_check
        %p118 = pneg %p56
      $region14: #{tpu_custom_call.1} parent=11 // pred_check_branch
        %120 = sbr.rel (%p118) target = $region16
      $region15: #{tpu_custom_call.1} parent=11 // pred_region
        _
      $region16: #{tpu_custom_call.1} parent=11 // pred_fallthru
        _
      // Predicated region
      $region17: #{tpu_custom_call.1} parent=11 // pred_check
        %p121 = pneg %p77
      $region18: #{tpu_custom_call.1} parent=11 // pred_check_branch
        %123 = sbr.rel (%p121) target = $region20
      $region19: #{tpu_custom_call.1} parent=11 // pred_region
        _
      $region20: #{tpu_custom_call.1} parent=11 // pred_fallthru
        _
    $region12: #{tpu_custom_call.1} parent=5 // pred_fallthru
      _
    %p124 = scmp.lt.s32.totalorder %s9, 2
    // Predicated region
    $region21: #{tpu_custom_call.1} parent=5 // pred_check
      %p125 = pneg %p124
    $region22: #{tpu_custom_call.1} parent=5 // pred_check_branch
      %127 = sbr.rel (%p125) target = $region24
    $region23: #{tpu_custom_call.1} parent=5 // pred_region
      // Predicated region
      $region25: #{tpu_custom_call.1} parent=23 // pred_check
        %p128 = pneg %p29
      $region26: #{tpu_custom_call.1} parent=23 // pred_check_branch
        %130 = sbr.rel (%p128) target = $region28
      $region27: #{tpu_custom_call.1} parent=23 // pred_region
        %s131 = smul.u32 65, %s9
        %p132 = scmp.lt.s32.totalorder %s131, 129
        %s133 = scalar_select %p132, %s131, 129
        %s134 = smul.addr %s133, 8
        %s135 = scalar_lea.vmem %s0, %s134
        %s136 = smul.u32 65, %s9
      $region28: #{tpu_custom_call.1} parent=23 // pred_fallthru
        _
    $region24: #{tpu_custom_call.1} parent=5 // pred_fallthru
      _
    %p137 = scmp.le.s32.totalorder 1, %s9
    %p138 = scmp.lt.s32.totalorder %s9, 3
    %p139 = pnand %p137, %p138
    %p140 = pneg %p139
    // Predicated region
    $region29: #{tpu_custom_call.1} parent=5 // pred_check
      _
    $region30: #{tpu_custom_call.1} parent=5 // pred_check_branch
      %142 = sbr.rel (%p139) target = $region32
    $region31: #{tpu_custom_call.1} parent=5 // pred_region
      %s143 = ssub.s32 %s9, 1
      %s144 = smul.u32 65, %s14
      %p145 = scmp.lt.s32.totalorder %s144, 129
      %s146 = scalar_select %p145, %s144, 129
      %s147 = smul.addr %s146, 8
      %s148 = scalar_lea.vmem %s0, %s147
      %p149 = pneg %p35
      %p150 = pneg %p32
      %p151 = pneg %p56
      %p152 = pneg %p53
      %p153 = pneg %p77
      %p154 = pneg %p74
      %p155 = pneg %p103
      %p156 = pneg %p100
      %s157 = smul.u32 65, %s14
      %p158 = scmp.lt.s32.totalorder %s157, 129
      %s159 = scalar_select %p158, %s157, 129
      %s160 = smul.addr %s159, 8
      %s161 = scalar_lea.vmem %s3, %s160
      %s162 = smul.u32 65, %s14
      %p163 = scmp.lt.s32.totalorder %s162, 129
      %s164 = scalar_select %p163, %s162, 129
      %s165 = smul.addr %s164, 8
      %s166 = scalar_lea.vmem %s0, %s165
      %s167 = smul.u32 65, %s14
      %s168 = smul.u32 65, %s14
      %p169 = scmp.lt.s32.totalorder %s168, 129
      %s170 = scalar_select %p169, %s168, 129
      %s171 = smul.addr %s170, 8
      %s172 = scalar_lea.vmem %s3, %s171
      %s173 = smul.u32 65, %s14
      %v174 = vld [vmem:[%s166] sm:$0xff]
      %v175 = vld [vmem:[%s166 + $0x8] sm:$0xff]
      %v176 = vld [vmem:[%s166 + $0x10] sm:$0xff]
      %v177 = vld [vmem:[%s166 + $0x18] sm:$0xff]
      %v178 = vld [vmem:[%s166 + $0x20] sm:$0xff]
      %v179 = vld [vmem:[%s166 + $0x28] sm:$0xff]
      %v180 = vld [vmem:[%s166 + $0x30] sm:$0xff]
      %v181 = vld [vmem:[%s166 + $0x38] sm:$0xff]
      %v182 = vld [vmem:[%s166 + $0x40] sm:$0xff]
      %v183 = vld [vmem:[%s166 + $0x48] sm:$0xff]
      %v184 = vld [vmem:[%s166 + $0x50] sm:$0xff]
      %v185 = vld [vmem:[%s166 + $0x58] sm:$0xff]
      %v186 = vld [vmem:[%s166 + $0x60] sm:$0xff]
      %v187 = vld [vmem:[%s166 + $0x68] sm:$0xff]
      %v188 = vld [vmem:[%s166 + $0x70] sm:$0xff]
      %v189 = vld [vmem:[%s166 + $0x78] sm:$0xff]
      %v190 = vld [vmem:[%s166 + $0x80] sm:$0xff]
      %v191 = vld [vmem:[%s166 + $0x88] sm:$0xff]
      %v192 = vld [vmem:[%s166 + $0x90] sm:$0xff]
      %v193 = vld [vmem:[%s166 + $0x98] sm:$0xff]
      %v194 = vld [vmem:[%s166 + $0xa0] sm:$0xff]
      %v195 = vld [vmem:[%s166 + $0xa8] sm:$0xff]
      %v196 = vld [vmem:[%s166 + $0xb0] sm:$0xff]
      %v197 = vld [vmem:[%s166 + $0xb8] sm:$0xff]
      %v198 = vld [vmem:[%s166 + $0xc0] sm:$0xff]
      %v199 = vld [vmem:[%s166 + $0xc8] sm:$0xff]
      %v200 = vld [vmem:[%s166 + $0xd0] sm:$0xff]
      %v201 = vld [vmem:[%s166 + $0xd8] sm:$0xff]
      %v202 = vld [vmem:[%s166 + $0xe0] sm:$0xff]
      %v203 = vld [vmem:[%s166 + $0xe8] sm:$0xff]
      %v204 = vld [vmem:[%s166 + $0xf0] sm:$0xff]
      %v205 = vld [vmem:[%s166 + $0xf8] sm:$0xff]
      %v206 = vld [vmem:[%s166 + $0x100] sm:$0xff]
      %v207 = vld [vmem:[%s166 + $0x108] sm:$0xff]
      %v208 = vld [vmem:[%s166 + $0x110] sm:$0xff]
      %v209 = vld [vmem:[%s166 + $0x118] sm:$0xff]
      %v210 = vld [vmem:[%s166 + $0x120] sm:$0xff]
      %v211 = vld [vmem:[%s166 + $0x128] sm:$0xff]
      %v212 = vld [vmem:[%s166 + $0x130] sm:$0xff]
      %v213 = vld [vmem:[%s166 + $0x138] sm:$0xff]
      %v214 = vld [vmem:[%s166 + $0x140] sm:$0xff]
      %v215 = vld [vmem:[%s166 + $0x148] sm:$0xff]
      %v216 = vld [vmem:[%s166 + $0x150] sm:$0xff]
      %v217 = vld [vmem:[%s166 + $0x158] sm:$0xff]
      %v218 = vld [vmem:[%s166 + $0x160] sm:$0xff]
      %v219 = vld [vmem:[%s166 + $0x168] sm:$0xff]
      %v220 = vld [vmem:[%s166 + $0x170] sm:$0xff]
      %v221 = vld [vmem:[%s166 + $0x178] sm:$0xff]
      %v222 = vld [vmem:[%s166 + $0x180] sm:$0xff]
      %v223 = vld [vmem:[%s166 + $0x188] sm:$0xff]
      %v224 = vld [vmem:[%s166 + $0x190] sm:$0xff]
      %v225 = vld [vmem:[%s166 + $0x198] sm:$0xff]
      %v226 = vld [vmem:[%s166 + $0x1a0] sm:$0xff]
      %v227 = vld [vmem:[%s166 + $0x1a8] sm:$0xff]
      %v228 = vld [vmem:[%s166 + $0x1b0] sm:$0xff]
      %v229 = vld [vmem:[%s166 + $0x1b8] sm:$0xff]
      %v230 = vld [vmem:[%s166 + $0x1c0] sm:$0xff]
      %v231 = vld [vmem:[%s166 + $0x1c8] sm:$0xff]
      %v232 = vld [vmem:[%s166 + $0x1d0] sm:$0xff]
      %v233 = vld [vmem:[%s166 + $0x1d8] sm:$0xff]
      %v234 = vld [vmem:[%s166 + $0x1e0] sm:$0xff]
      %v235 = vld [vmem:[%s166 + $0x1e8] sm:$0xff]
      %v236 = vld [vmem:[%s166 + $0x1f0] sm:$0xff]
      %v237 = vld [vmem:[%s166 + $0x1f8] sm:$0xff]
      %v238 = vld [vmem:[%s166 + $0x200] sm:$0xff]
      %v239 = vld [vmem:[%s1] sm:$0xff]
      %v240 = vld [vmem:[%s1 + $0x8] sm:$0xff]
      %v241 = vld [vmem:[%s2] sm:$0x1]
      %v243 = vperm.slane %v241, 0
      %vm245 = vcmask 130048
      %v247 = vsel %vm245, %v174, 0
      %v250 = vsel %vm245, %v175, 0
      %v253 = vsel %vm245, %v176, 0
      %v256 = vsel %vm245, %v177, 0
      %v259 = vsel %vm245, %v178, 0
      %v262 = vsel %vm245, %v179, 0
      %v265 = vsel %vm245, %v180, 0
      %v268 = vsel %vm245, %v181, 0
      %v271 = vsel %vm245, %v182, 0
      %v274 = vsel %vm245, %v183, 0
      %v277 = vsel %vm245, %v184, 0
      %v280 = vsel %vm245, %v185, 0
      %v283 = vsel %vm245, %v186, 0
      %v286 = vsel %vm245, %v187, 0
      %v289 = vsel %vm245, %v188, 0
      %v292 = vsel %vm245, %v189, 0
      %v295 = vsel %vm245, %v190, 0
      %v298 = vsel %vm245, %v191, 0
      %v301 = vsel %vm245, %v192, 0
      %v304 = vsel %vm245, %v193, 0
      %v307 = vsel %vm245, %v194, 0
      %v310 = vsel %vm245, %v195, 0
      %v313 = vsel %vm245, %v196, 0
      %v316 = vsel %vm245, %v197, 0
      %v319 = vsel %vm245, %v198, 0
      %v322 = vsel %vm245, %v199, 0
      %v325 = vsel %vm245, %v200, 0
      %v328 = vsel %vm245, %v201, 0
      %v331 = vsel %vm245, %v202, 0
      %v334 = vsel %vm245, %v203, 0
      %v337 = vsel %vm245, %v204, 0
      %v340 = vsel %vm245, %v205, 0
      %v343 = vsel %vm245, %v206, 0
      %v346 = vsel %vm245, %v207, 0
      %v349 = vsel %vm245, %v208, 0
      %v352 = vsel %vm245, %v209, 0
      %v355 = vsel %vm245, %v210, 0
      %v358 = vsel %vm245, %v211, 0
      %v361 = vsel %vm245, %v212, 0
      %v364 = vsel %vm245, %v213, 0
      %v367 = vsel %vm245, %v214, 0
      %v370 = vsel %vm245, %v215, 0
      %v373 = vsel %vm245, %v216, 0
      %v376 = vsel %vm245, %v217, 0
      %v379 = vsel %vm245, %v218, 0
      %v382 = vsel %vm245, %v219, 0
      %v385 = vsel %vm245, %v220, 0
      %v388 = vsel %vm245, %v221, 0
      %v391 = vsel %vm245, %v222, 0
      %v394 = vsel %vm245, %v223, 0
      %v397 = vsel %vm245, %v224, 0
      %v400 = vsel %vm245, %v225, 0
      %v403 = vsel %vm245, %v226, 0
      %v406 = vsel %vm245, %v227, 0
      %v409 = vsel %vm245, %v228, 0
      %v412 = vsel %vm245, %v229, 0
      %v415 = vsel %vm245, %v230, 0
      %v418 = vsel %vm245, %v231, 0
      %v421 = vsel %vm245, %v232, 0
      %v424 = vsel %vm245, %v233, 0
      %v427 = vsel %vm245, %v234, 0
      %v430 = vsel %vm245, %v235, 0
      %v433 = vsel %vm245, %v236, 0
      %v436 = vsel %vm245, %v237, 0
      %v439 = vsel %vm245, %v238, 0
      %441 = vmatpush.msra.mxu0 0.0
      %442 = vmatpush.msra.mxu0 0.0
      %443 = vmatpush.msra.mxu0 0.0
      %444 = vmatpush.msra.mxu0 0.0
      %445 = vmatpush.msra.mxu0 0.0
      %446 = vmatpush.msra.mxu0 0.0
      %447 = vmatpush.msra.mxu0 0.0
      %448 = vmatpush.msra.mxu0 0.0
      %449 = vmatpush.msra.mxu0 0.0
      %450 = vmatpush.msra.mxu0 0.0
      %451 = vmatpush.msra.mxu0 0.0
      %452 = vmatpush.msra.mxu0 0.0
      %453 = vmatpush.msra.mxu0 0.0
      %454 = vmatpush.msra.mxu0 0.0
      %455 = vmatpush.msra.mxu0 %v240
      %456 = vmatpush.msra.mxu0 %v239
      %457 = vmatmul.f32.gmra.mxu0 %v247
      %v458 = vpop.f32.mrf.mxu0
      %v459 = vadd.f32 %v243, %v458
      %460 = vmatmul.f32.gmra.mxu0 %v250
      %v461 = vpop.f32.mrf.mxu0
      %v462 = vadd.f32 %v243, %v461
      %463 = vmatmul.f32.gmra.mxu0 %v253
      %v464 = vpop.f32.mrf.mxu0
      %v465 = vadd.f32 %v243, %v464
      %466 = vmatmul.f32.gmra.mxu0 %v256
      %v467 = vpop.f32.mrf.mxu0
      %v468 = vadd.f32 %v243, %v467
      %469 = vmatmul.f32.gmra.mxu0 %v259
      %v470 = vpop.f32.mrf.mxu0
      %v471 = vadd.f32 %v243, %v470
      %472 = vmatmul.f32.gmra.mxu0 %v262
      %v473 = vpop.f32.mrf.mxu0
      %v474 = vadd.f32 %v243, %v473
      %475 = vmatmul.f32.gmra.mxu0 %v265
      %v476 = vpop.f32.mrf.mxu0
      %v477 = vadd.f32 %v243, %v476
      %478 = vmatmul.f32.gmra.mxu0 %v268
      %v479 = vpop.f32.mrf.mxu0
      %v480 = vadd.f32 %v243, %v479
      %481 = vmatmul.f32.gmra.mxu0 %v271
      %v482 = vpop.f32.mrf.mxu0
      %v483 = vadd.f32 %v243, %v482
      %484 = vmatmul.f32.gmra.mxu0 %v274
      %v485 = vpop.f32.mrf.mxu0
      %v486 = vadd.f32 %v243, %v485
      %487 = vmatmul.f32.gmra.mxu0 %v277
      %v488 = vpop.f32.mrf.mxu0
      %v489 = vadd.f32 %v243, %v488
      %490 = vmatmul.f32.gmra.mxu0 %v280
      %v491 = vpop.f32.mrf.mxu0
      %v492 = vadd.f32 %v243, %v491
      %493 = vmatmul.f32.gmra.mxu0 %v283
      %v494 = vpop.f32.mrf.mxu0
      %v495 = vadd.f32 %v243, %v494
      %496 = vmatmul.f32.gmra.mxu0 %v286
      %v497 = vpop.f32.mrf.mxu0
      %v498 = vadd.f32 %v243, %v497
      %499 = vmatmul.f32.gmra.mxu0 %v289
      %v500 = vpop.f32.mrf.mxu0
      %v501 = vadd.f32 %v243, %v500
      %502 = vmatmul.f32.gmra.mxu0 %v292
      %v503 = vpop.f32.mrf.mxu0
      %v504 = vadd.f32 %v243, %v503
      %505 = vmatmul.f32.gmra.mxu0 %v295
      %v506 = vpop.f32.mrf.mxu0
      %v507 = vadd.f32 %v243, %v506
      %508 = vmatmul.f32.gmra.mxu0 %v298
      %v509 = vpop.f32.mrf.mxu0
      %v510 = vadd.f32 %v243, %v509
      %511 = vmatmul.f32.gmra.mxu0 %v301
      %v512 = vpop.f32.mrf.mxu0
      %v513 = vadd.f32 %v243, %v512
      %514 = vmatmul.f32.gmra.mxu0 %v304
      %v515 = vpop.f32.mrf.mxu0
      %v516 = vadd.f32 %v243, %v515
      %517 = vmatmul.f32.gmra.mxu0 %v307
      %v518 = vpop.f32.mrf.mxu0
      %v519 = vadd.f32 %v243, %v518
      %520 = vmatmul.f32.gmra.mxu0 %v310
      %v521 = vpop.f32.mrf.mxu0
      %v522 = vadd.f32 %v243, %v521
      %523 = vmatmul.f32.gmra.mxu0 %v313
      %v524 = vpop.f32.mrf.mxu0
      %v525 = vadd.f32 %v243, %v524
      %526 = vmatmul.f32.gmra.mxu0 %v316
      %v527 = vpop.f32.mrf.mxu0
      %v528 = vadd.f32 %v243, %v527
      %529 = vmatmul.f32.gmra.mxu0 %v319
      %v530 = vpop.f32.mrf.mxu0
      %v531 = vadd.f32 %v243, %v530
      %532 = vmatmul.f32.gmra.mxu0 %v322
      %v533 = vpop.f32.mrf.mxu0
      %v534 = vadd.f32 %v243, %v533
      %535 = vmatmul.f32.gmra.mxu0 %v325
      %v536 = vpop.f32.mrf.mxu0
      %v537 = vadd.f32 %v243, %v536
      %538 = vmatmul.f32.gmra.mxu0 %v328
      %v539 = vpop.f32.mrf.mxu0
      %v540 = vadd.f32 %v243, %v539
      %541 = vmatmul.f32.gmra.mxu0 %v331
      %v542 = vpop.f32.mrf.mxu0
      %v543 = vadd.f32 %v243, %v542
      %544 = vmatmul.f32.gmra.mxu0 %v334
      %v545 = vpop.f32.mrf.mxu0
      %v546 = vadd.f32 %v243, %v545
      %547 = vmatmul.f32.gmra.mxu0 %v337
      %v548 = vpop.f32.mrf.mxu0
      %v549 = vadd.f32 %v243, %v548
      %550 = vmatmul.f32.gmra.mxu0 %v340
      %v551 = vpop.f32.mrf.mxu0
      %v552 = vadd.f32 %v243, %v551
      %553 = vmatmul.f32.gmra.mxu0 %v343
      %v554 = vpop.f32.mrf.mxu0
      %v555 = vadd.f32 %v243, %v554
      %556 = vmatmul.f32.gmra.mxu0 %v346
      %v557 = vpop.f32.mrf.mxu0
      %v558 = vadd.f32 %v243, %v557
      %559 = vmatmul.f32.gmra.mxu0 %v349
      %v560 = vpop.f32.mrf.mxu0
      %v561 = vadd.f32 %v243, %v560
      %562 = vmatmul.f32.gmra.mxu0 %v352
      %v563 = vpop.f32.mrf.mxu0
      %v564 = vadd.f32 %v243, %v563
      %565 = vmatmul.f32.gmra.mxu0 %v355
      %v566 = vpop.f32.mrf.mxu0
      %v567 = vadd.f32 %v243, %v566
      %568 = vmatmul.f32.gmra.mxu0 %v358
      %v569 = vpop.f32.mrf.mxu0
      %v570 = vadd.f32 %v243, %v569
      %571 = vmatmul.f32.gmra.mxu0 %v361
      %v572 = vpop.f32.mrf.mxu0
      %v573 = vadd.f32 %v243, %v572
      %574 = vmatmul.f32.gmra.mxu0 %v364
      %v575 = vpop.f32.mrf.mxu0
      %v576 = vadd.f32 %v243, %v575
      %577 = vmatmul.f32.gmra.mxu0 %v367
      %v578 = vpop.f32.mrf.mxu0
      %v579 = vadd.f32 %v243, %v578
      %580 = vmatmul.f32.gmra.mxu0 %v370
      %v581 = vpop.f32.mrf.mxu0
      %v582 = vadd.f32 %v243, %v581
      %583 = vmatmul.f32.gmra.mxu0 %v373
      %v584 = vpop.f32.mrf.mxu0
      %v585 = vadd.f32 %v243, %v584
      %586 = vmatmul.f32.gmra.mxu0 %v376
      %v587 = vpop.f32.mrf.mxu0
      %v588 = vadd.f32 %v243, %v587
      %589 = vmatmul.f32.gmra.mxu0 %v379
      %v590 = vpop.f32.mrf.mxu0
      %v591 = vadd.f32 %v243, %v590
      %592 = vmatmul.f32.gmra.mxu0 %v382
      %v593 = vpop.f32.mrf.mxu0
      %v594 = vadd.f32 %v243, %v593
      %595 = vmatmul.f32.gmra.mxu0 %v385
      %v596 = vpop.f32.mrf.mxu0
      %v597 = vadd.f32 %v243, %v596
      %598 = vmatmul.f32.gmra.mxu0 %v388
      %v599 = vpop.f32.mrf.mxu0
      %v600 = vadd.f32 %v243, %v599
      %601 = vmatmul.f32.gmra.mxu0 %v391
      %v602 = vpop.f32.mrf.mxu0
      %v603 = vadd.f32 %v243, %v602
      %604 = vmatmul.f32.gmra.mxu0 %v394
      %v605 = vpop.f32.mrf.mxu0
      %v606 = vadd.f32 %v243, %v605
      %607 = vmatmul.f32.gmra.mxu0 %v397
      %v608 = vpop.f32.mrf.mxu0
      %v609 = vadd.f32 %v243, %v608
      %610 = vmatmul.f32.gmra.mxu0 %v400
      %v611 = vpop.f32.mrf.mxu0
      %v612 = vadd.f32 %v243, %v611
      %613 = vmatmul.f32.gmra.mxu0 %v403
      %v614 = vpop.f32.mrf.mxu0
      %v615 = vadd.f32 %v243, %v614
      %616 = vmatmul.f32.gmra.mxu0 %v406
      %v617 = vpop.f32.mrf.mxu0
      %v618 = vadd.f32 %v243, %v617
      %619 = vmatmul.f32.gmra.mxu0 %v409
      %v620 = vpop.f32.mrf.mxu0
      %v621 = vadd.f32 %v243, %v620
      %622 = vmatmul.f32.gmra.mxu0 %v412
      %v623 = vpop.f32.mrf.mxu0
      %v624 = vadd.f32 %v243, %v623
      %625 = vmatmul.f32.gmra.mxu0 %v415
      %v626 = vpop.f32.mrf.mxu0
      %v627 = vadd.f32 %v243, %v626
      %628 = vmatmul.f32.gmra.mxu0 %v418
      %v629 = vpop.f32.mrf.mxu0
      %v630 = vadd.f32 %v243, %v629
      %631 = vmatmul.f32.gmra.mxu0 %v421
      %v632 = vpop.f32.mrf.mxu0
      %v633 = vadd.f32 %v243, %v632
      %634 = vmatmul.f32.gmra.mxu0 %v424
      %v635 = vpop.f32.mrf.mxu0
      %v636 = vadd.f32 %v243, %v635
      %637 = vmatmul.f32.gmra.mxu0 %v427
      %v638 = vpop.f32.mrf.mxu0
      %v639 = vadd.f32 %v243, %v638
      %640 = vmatmul.f32.gmra.mxu0 %v430
      %v641 = vpop.f32.mrf.mxu0
      %v642 = vadd.f32 %v243, %v641
      %643 = vmatmul.f32.gmra.mxu0 %v433
      %v644 = vpop.f32.mrf.mxu0
      %v645 = vadd.f32 %v243, %v644
      %646 = vmatmul.f32.gmra.mxu0 %v436
      %v647 = vpop.f32.mrf.mxu0
      %v648 = vadd.f32 %v243, %v647
      %649 = vmatmul.f32.gmra.mxu0 %v439
      %v650 = vpop.f32.mrf.mxu0
      %v651 = vadd.f32 %v243, %v650
      %652 = vdwg.mxu0
      %vm653 = vcmask 261120
      %654 = vst.msk [vmem:[%s172] sm:$0xff] %vm653, %v459
      %655 = vst.msk [vmem:[%s172 + $0x8] sm:$0xff] %vm653, %v462
      %656 = vst.msk [vmem:[%s172 + $0x10] sm:$0xff] %vm653, %v465
      %657 = vst.msk [vmem:[%s172 + $0x18] sm:$0xff] %vm653, %v468
      %658 = vst.msk [vmem:[%s172 + $0x20] sm:$0xff] %vm653, %v471
      %659 = vst.msk [vmem:[%s172 + $0x28] sm:$0xff] %vm653, %v474
      %660 = vst.msk [vmem:[%s172 + $0x30] sm:$0xff] %vm653, %v477
      %661 = vst.msk [vmem:[%s172 + $0x38] sm:$0xff] %vm653, %v480
      %662 = vst.msk [vmem:[%s172 + $0x40] sm:$0xff] %vm653, %v483
      %663 = vst.msk [vmem:[%s172 + $0x48] sm:$0xff] %vm653, %v486
      %664 = vst.msk [vmem:[%s172 + $0x50] sm:$0xff] %vm653, %v489
      %665 = vst.msk [vmem:[%s172 + $0x58] sm:$0xff] %vm653, %v492
      %666 = vst.msk [vmem:[%s172 + $0x60] sm:$0xff] %vm653, %v495
      %667 = vst.msk [vmem:[%s172 + $0x68] sm:$0xff] %vm653, %v498
      %668 = vst.msk [vmem:[%s172 + $0x70] sm:$0xff] %vm653, %v501
      %669 = vst.msk [vmem:[%s172 + $0x78] sm:$0xff] %vm653, %v504
      %670 = vst.msk [vmem:[%s172 + $0x80] sm:$0xff] %vm653, %v507
      %671 = vst.msk [vmem:[%s172 + $0x88] sm:$0xff] %vm653, %v510
      %672 = vst.msk [vmem:[%s172 + $0x90] sm:$0xff] %vm653, %v513
      %673 = vst.msk [vmem:[%s172 + $0x98] sm:$0xff] %vm653, %v516
      %674 = vst.msk [vmem:[%s172 + $0xa0] sm:$0xff] %vm653, %v519
      %675 = vst.msk [vmem:[%s172 + $0xa8] sm:$0xff] %vm653, %v522
      %676 = vst.msk [vmem:[%s172 + $0xb0] sm:$0xff] %vm653, %v525
      %677 = vst.msk [vmem:[%s172 + $0xb8] sm:$0xff] %vm653, %v528
      %678 = vst.msk [vmem:[%s172 + $0xc0] sm:$0xff] %vm653, %v531
      %679 = vst.msk [vmem:[%s172 + $0xc8] sm:$0xff] %vm653, %v534
      %680 = vst.msk [vmem:[%s172 + $0xd0] sm:$0xff] %vm653, %v537
      %681 = vst.msk [vmem:[%s172 + $0xd8] sm:$0xff] %vm653, %v540
      %682 = vst.msk [vmem:[%s172 + $0xe0] sm:$0xff] %vm653, %v543
      %683 = vst.msk [vmem:[%s172 + $0xe8] sm:$0xff] %vm653, %v546
      %684 = vst.msk [vmem:[%s172 + $0xf0] sm:$0xff] %vm653, %v549
      %685 = vst.msk [vmem:[%s172 + $0xf8] sm:$0xff] %vm653, %v552
      %686 = vst.msk [vmem:[%s172 + $0x100] sm:$0xff] %vm653, %v555
      %687 = vst.msk [vmem:[%s172 + $0x108] sm:$0xff] %vm653, %v558
      %688 = vst.msk [vmem:[%s172 + $0x110] sm:$0xff] %vm653, %v561
      %689 = vst.msk [vmem:[%s172 + $0x118] sm:$0xff] %vm653, %v564
      %690 = vst.msk [vmem:[%s172 + $0x120] sm:$0xff] %vm653, %v567
      %691 = vst.msk [vmem:[%s172 + $0x128] sm:$0xff] %vm653, %v570
      %692 = vst.msk [vmem:[%s172 + $0x130] sm:$0xff] %vm653, %v573
      %693 = vst.msk [vmem:[%s172 + $0x138] sm:$0xff] %vm653, %v576
      %694 = vst.msk [vmem:[%s172 + $0x140] sm:$0xff] %vm653, %v579
      %695 = vst.msk [vmem:[%s172 + $0x148] sm:$0xff] %vm653, %v582
      %696 = vst.msk [vmem:[%s172 + $0x150] sm:$0xff] %vm653, %v585
      %697 = vst.msk [vmem:[%s172 + $0x158] sm:$0xff] %vm653, %v588
      %698 = vst.msk [vmem:[%s172 + $0x160] sm:$0xff] %vm653, %v591
      %699 = vst.msk [vmem:[%s172 + $0x168] sm:$0xff] %vm653, %v594
      %700 = vst.msk [vmem:[%s172 + $0x170] sm:$0xff] %vm653, %v597
      %701 = vst.msk [vmem:[%s172 + $0x178] sm:$0xff] %vm653, %v600
      %702 = vst.msk [vmem:[%s172 + $0x180] sm:$0xff] %vm653, %v603
      %703 = vst.msk [vmem:[%s172 + $0x188] sm:$0xff] %vm653, %v606
      %704 = vst.msk [vmem:[%s172 + $0x190] sm:$0xff] %vm653, %v609
      %705 = vst.msk [vmem:[%s172 + $0x198] sm:$0xff] %vm653, %v612
      %706 = vst.msk [vmem:[%s172 + $0x1a0] sm:$0xff] %vm653, %v615
      %707 = vst.msk [vmem:[%s172 + $0x1a8] sm:$0xff] %vm653, %v618
      %708 = vst.msk [vmem:[%s172 + $0x1b0] sm:$0xff] %vm653, %v621
      %709 = vst.msk [vmem:[%s172 + $0x1b8] sm:$0xff] %vm653, %v624
      %710 = vst.msk [vmem:[%s172 + $0x1c0] sm:$0xff] %vm653, %v627
      %711 = vst.msk [vmem:[%s172 + $0x1c8] sm:$0xff] %vm653, %v630
      %712 = vst.msk [vmem:[%s172 + $0x1d0] sm:$0xff] %vm653, %v633
      %713 = vst.msk [vmem:[%s172 + $0x1d8] sm:$0xff] %vm653, %v636
      %714 = vst.msk [vmem:[%s172 + $0x1e0] sm:$0xff] %vm653, %v639
      %715 = vst.msk [vmem:[%s172 + $0x1e8] sm:$0xff] %vm653, %v642
      %716 = vst.msk [vmem:[%s172 + $0x1f0] sm:$0xff] %vm653, %v645
      %717 = vst.msk [vmem:[%s172 + $0x1f8] sm:$0xff] %vm653, %v648
      %718 = vst.msk [vmem:[%s172 + $0x200] sm:$0xff] %vm653, %v651
      %s719 = smul.u32 65, %s14
      %p720 = scmp.lt.s32.totalorder %s719, 129
      %s721 = scalar_select %p720, %s719, 129
      %s722 = smul.addr %s721, 8
      %s723 = scalar_lea.vmem %s3, %s722
      // Predicated region
      $region33: #{tpu_custom_call.1} parent=31 // pred_check
        %p724 = pneg %p100
      $region34: #{tpu_custom_call.1} parent=31 // pred_check_branch
        %726 = sbr.rel (%p724) target = $region36
      $region35: #{tpu_custom_call.1} parent=31 // pred_region
        %s727 = smul.u32 65, %s14
      $region36: #{tpu_custom_call.1} parent=31 // pred_fallthru
        _
    $region32: #{tpu_custom_call.1} parent=5 // pred_fallthru
      _
    %p728 = scmp.le.s32.totalorder 2, %s9
    // Predicated region
    $region37: #{tpu_custom_call.1} parent=5 // pred_check
      %p729 = pneg %p728
    $region38: #{tpu_custom_call.1} parent=5 // pred_check_branch
      %731 = sbr.rel (%p729) target = $region40
    $region39: #{tpu_custom_call.1} parent=5 // pred_region
      %s732 = ssub.s32 %s9, 2
      // Predicated region
      $region41: #{tpu_custom_call.1} parent=39 // pred_check
        %p733 = pneg %p106
      $region42: #{tpu_custom_call.1} parent=39 // pred_check_branch
        %735 = sbr.rel (%p733) target = $region44
      $region43: #{tpu_custom_call.1} parent=39 // pred_region
        %s736 = smul.u32 65, %s15
        %p737 = scmp.lt.s32.totalorder %s736, 129
        %s738 = scalar_select %p737, %s736, 129
        %s739 = smul.addr %s738, 8
        %s740 = scalar_lea.vmem %s3, %s739
      $region44: #{tpu_custom_call.1} parent=39 // pred_fallthru
        _
    $region40: #{tpu_custom_call.1} parent=5 // pred_fallthru
      _
  $region6: #{tpu_custom_call.1} parent=0 // loop_footer
    %s13 = sadd.s32 1, %s9
  $region7: #{tpu_custom_call.1} parent=0 // loop_footer_branch
    %8 = sbr.rel target = $region3
  $region8: #{tpu_custom_call.1} parent=0 // loop_exit
    _

</llo_original>
